<compile_context>
chip_gen: v5e
topology: v5e:2x2
jax: 0.10.0
libtpu: 0.0.40
codegen_flags: <defaults>
</compile_context>

<pallas_src>
import jax
import jax.numpy as jnp
from jax.experimental import pallas as pl
from jax.experimental.pallas import tpu as pltpu

_EPS = 1e-08  # matches MyLayerNorm.forward (epsilon = 1e-08)


def _layernorm_kernel(x_ref, gamma_ref, beta_ref, o_ref):
    # x_ref block: (Nb, F) where F = T*d. Per-row (per-sample) statistics.
    x = x_ref[...].astype(jnp.float32)
    mean = jnp.mean(x, axis=-1, keepdims=True)            # (Nb, 1)
    xc = x - mean                                         # reused for var & norm
    var = jnp.mean(xc * xc, axis=-1, keepdims=True)       # biased (unbiased=False)
    inv = jax.lax.rsqrt(var + _EPS)                       # EUP rsqrt, no divide
    norm = xc * inv                                       # (Nb, F)
    gamma = gamma_ref[...].astype(jnp.float32)            # (1, F), broadcasts
    beta = beta_ref[...].astype(jnp.float32)              # (1, F), broadcasts
    o_ref[...] = (gamma * norm + beta).astype(o_ref.dtype)  # single fused store


def _round_down8(n):
    return (n // 8) * 8


def _block_target_bytes():
    """Per-generation block budget (HBM-bound kernel; keep well inside the
    scoped-VMEM default counting double-buffered in/out + f32 temps)."""
    try:
        kind = jax.devices()[0].device_kind.lower()
    except Exception:  # no device info -> be conservative
        kind = ""
    if "v5" in kind:
        return 2 << 20   # v5e: 16 MiB scoped default
    return 4 << 20       # v6e / v7x: 32 MiB scoped default


def _choose_block_rows(n_rows, row_elems, target_bytes):
    """Fixed multiple-of-8 row block (ragged tail handled by cdiv grid +
    Pallas write masking). Caps block bytes and guarantees multiple grid
    steps on larger batches so both v7x TensorCores get work."""
    if n_rows <= 8:
        # Block equals the full row extent (allowed even if < 8).
        return n_rows
    max_rows = max(8, _round_down8(target_bytes // (row_elems * 4)))
    nb = max_rows
    # Guarantee pipeline depth / megacore sharding.
    if n_rows >= 32:
        nb = min(nb, max(8, _round_down8(n_rows // 4)))
    elif n_rows >= 16:
        nb = min(nb, max(8, _round_down8(n_rows // 2)))
    return max(8, nb)


def my_layer_norm(x, gamma, beta):
    """LayerNorm over the flattened (T, d) of each sample, then affine with
    per-(T, d) gamma/beta, matching MyLayerNorm.forward.

    Note: at tiny shapes (e.g. the N=2 demo) a standalone pallas_call is pure
    launch overhead; in production this should be fused into the surrounding
    op and the Pallas path kept for large-N batches."""
    N, T, d = x.shape
    F = T * d
    # Lane-dense layout: last dim becomes T*d (multiple of 128 for d=32, T=8).
    # (T, d) is contiguous, so these reshapes are free layout plumbing.
    x2 = x.reshape(N, F)
    g2 = gamma.reshape(1, F)
    b2 = beta.reshape(1, F)

    Nb = _choose_block_rows(N, F, _block_target_bytes())
    grid = (pl.cdiv(N, Nb),)

    cost = pl.CostEstimate(
        flops=6 * N * F,
        transcendentals=N,
        bytes_accessed=2 * N * F * 4 + 2 * F * 4,
    )

    out2 = pl.pallas_call(
        _layernorm_kernel,
        out_shape=jax.ShapeDtypeStruct((N, F), x.dtype),
        grid_spec=pl.GridSpec(
            grid=grid,
            in_specs=[
                pl.BlockSpec((Nb, F), lambda i: (i, 0)),
                # Constant block index: gamma/beta stay resident, no re-DMA.
                pl.BlockSpec((1, F), lambda i: (0, 0)),
                pl.BlockSpec((1, F), lambda i: (0, 0)),
            ],
            out_specs=pl.BlockSpec((Nb, F), lambda i: (i, 0)),
        ),
        compiler_params=pltpu.CompilerParams(
            dimension_semantics=("parallel",),
        ),
        cost_estimate=cost,
    )(x2, g2, b2)
    return out2.reshape(N, T, d)


def reference_layer_norm(x, gamma, beta):
    N, T, d = x.shape
    xr = x.reshape(N, -1).astype(jnp.float32)
    mean = jnp.mean(xr, axis=1, keepdims=True)
    var = jnp.mean((xr - mean) ** 2, axis=1, keepdims=True)
    norm = ((xr - mean) / jnp.sqrt(var + _EPS)).reshape(N, T, d)
    return (gamma * norm + beta).astype(x.dtype)


if __name__ == "__main__":
    # Shapes implied by the module: input_dim = (T, d) = (8, 32), batch N = 2.
    key = jax.random.PRNGKey(0)

    # nn.Parameter(torch.ones(T, d)) / nn.Parameter(torch.zeros(T, d))
    T, d = 8, 32
    gamma = jnp.ones((T, d), dtype=jnp.float32)
    beta = jnp.zeros((T, d), dtype=jnp.float32)

    # Demo shape from the module spec (N=2) plus a larger, ragged batch that
    # exercises the cdiv grid / masked tail and the multi-step pipeline.
    for N in (2, 37):
        kx = jax.random.fold_in(key, N)
        x = jax.random.normal(kx, (N, T, d), dtype=jnp.float32)

        out = my_layer_norm(x, gamma, beta)
        jax.block_until_ready(out)

        ref = reference_layer_norm(x, gamma, beta)
        assert out.shape == (N, T, d)
        assert jnp.allclose(out, ref, atol=1e-5, rtol=1e-5), (
            f"mismatch vs reference at N={N}"
        )

    print("KERNEL_OK")
</pallas_src>

<mosaic_0001>
module attributes {stable_mosaic.version = 11 : i64} {
  func.func @_layernorm_kernel(%arg0: i32, %arg1: memref<2x256xf32, #tpu.memory_space<vmem>>, %arg2: memref<1x256xf32, #tpu.memory_space<vmem>>, %arg3: memref<1x256xf32, #tpu.memory_space<vmem>>, %arg4: memref<2x256xf32, #tpu.memory_space<vmem>>) attributes {dimension_semantics = [#tpu.dimension_semantics<parallel>], iteration_bounds = array<i64: 1>, scalar_prefetch = 0 : i64, scratch_operands = 0 : i64, tpu.core_type = #tpu.core_type<tc>, window_params = [{transform_indices = @transform_0, window_bounds = array<i64: 2, 256>}, {pipeline_mode = #tpu.pipeline_mode<synchronous>, transform_indices = @transform_1, window_bounds = array<i64: 1, 256>}, {pipeline_mode = #tpu.pipeline_mode<synchronous>, transform_indices = @transform_2, window_bounds = array<i64: 1, 256>}, {transform_indices = @transform_3, window_bounds = array<i64: 2, 256>}]} {
    %c0 = arith.constant 0 : index
    %c0_0 = arith.constant 0 : index
    %0 = vector.load %arg1[%c0, %c0_0] : memref<2x256xf32, #tpu.memory_space<vmem>>, vector<2x256xf32>
    %cst = arith.constant dense<0.000000e+00> : vector<2xf32>
    %1 = vector.multi_reduction <add>, %0, %cst [1] : vector<2x256xf32> to vector<2xf32>
    %2 = vector.shape_cast %1 : vector<2xf32> to vector<2x1xf32>
    %cst_1 = arith.constant 2.560000e+02 : f32
    %3 = vector.broadcast %cst_1 : f32 to vector<2x1xf32>
    %4 = arith.divf %2, %3 : vector<2x1xf32>
    %5 = vector.broadcast %4 : vector<2x1xf32> to vector<2x256xf32>
    %6 = arith.subf %0, %5 : vector<2x256xf32>
    %7 = arith.mulf %6, %6 : vector<2x256xf32>
    %cst_2 = arith.constant dense<0.000000e+00> : vector<2xf32>
    %8 = vector.multi_reduction <add>, %7, %cst_2 [1] : vector<2x256xf32> to vector<2xf32>
    %9 = vector.shape_cast %8 : vector<2xf32> to vector<2x1xf32>
    %cst_3 = arith.constant 2.560000e+02 : f32
    %10 = vector.broadcast %cst_3 : f32 to vector<2x1xf32>
    %11 = arith.divf %9, %10 : vector<2x1xf32>
    %cst_4 = arith.constant 9.99999993E-9 : f32
    %12 = vector.broadcast %cst_4 : f32 to vector<2x1xf32>
    %13 = arith.addf %11, %12 : vector<2x1xf32>
    %14 = math.rsqrt %13 : vector<2x1xf32>
    %15 = vector.broadcast %14 : vector<2x1xf32> to vector<2x256xf32>
    %16 = arith.mulf %6, %15 : vector<2x256xf32>
    %c0_5 = arith.constant 0 : index
    %c0_6 = arith.constant 0 : index
    %17 = vector.load %arg2[%c0_5, %c0_6] : memref<1x256xf32, #tpu.memory_space<vmem>>, vector<1x256xf32>
    %c0_7 = arith.constant 0 : index
    %c0_8 = arith.constant 0 : index
    %18 = vector.load %arg3[%c0_7, %c0_8] : memref<1x256xf32, #tpu.memory_space<vmem>>, vector<1x256xf32>
    %19 = vector.broadcast %17 : vector<1x256xf32> to vector<2x256xf32>
    %20 = arith.mulf %19, %16 : vector<2x256xf32>
    %21 = vector.broadcast %18 : vector<1x256xf32> to vector<2x256xf32>
    %22 = arith.addf %20, %21 : vector<2x256xf32>
    %c0_9 = arith.constant 0 : index
    %c0_10 = arith.constant 0 : index
    %23 = vector.load %arg4[%c0_9, %c0_10] : memref<2x256xf32, #tpu.memory_space<vmem>>, vector<2x256xf32>
    tpu.vector_store %arg4[%c0_9, %c0_10], %22 {strides = array<i32>} : memref<2x256xf32, #tpu.memory_space<vmem>>, vector<2x256xf32>,
    return
  }
  func.func @transform_0(%arg0: i32) -> (i32, i32) {
    %c0_i32 = arith.constant 0 : i32
    %c0_i32_0 = arith.constant 0 : i32
    return %arg0, %c0_i32 : i32, i32
  }
  func.func @transform_1(%arg0: i32) -> (i32, i32) {
    %c0_i32 = arith.constant 0 : i32
    %c0_i32_0 = arith.constant 0 : i32
    %c0_i32_1 = arith.constant 0 : i32
    return %c0_i32, %c0_i32_0 : i32, i32
  }
  func.func @transform_2(%arg0: i32) -> (i32, i32) {
    %c0_i32 = arith.constant 0 : i32
    %c0_i32_0 = arith.constant 0 : i32
    %c0_i32_1 = arith.constant 0 : i32
    return %c0_i32, %c0_i32_0 : i32, i32
  }
  func.func @transform_3(%arg0: i32) -> (i32, i32) {
    %c0_i32 = arith.constant 0 : i32
    %c0_i32_0 = arith.constant 0 : i32
    return %arg0, %c0_i32 : i32, i32
  }
}

</mosaic_0001>

<llo_original>
// kernel: tpu_custom_call.1
$region0: #{tpu_custom_call.1}
  #allocation0 [shape = 'u32[]', space=smem, size = 0x4, offset = 0x4, fixed_abs, tag = 'smem constant byte address 0x4 - core index']
  #allocation1 [shape = 'u32[72,128]{1,0:T(1,128)}', space=vmem, size = 0x9000, scoped, tag = 'internal scratch']
  %s0 = inlined_call_operand.hbm [shape: f32[2,256], index: 0, kind: input, shape index: {}]
  %s1 = inlined_call_operand.hbm [shape: f32[1,256], index: 1, kind: input, shape index: {}]
  %s2 = inlined_call_operand.hbm [shape: f32[1,256], index: 2, kind: input, shape index: {}]
  %s3 = inlined_call_operand.hbm [shape: f32[2,256], index: 3, kind: output, shape index: {}]
  %s4 = sld [smem:[#allocation0]]
  $region34: #{tpu_custom_call.1} parent=0
    _
  %s6 = ssub.s32 1, %s4
  %s7 = scalar_select 0, %s6, %s4
  $region1: #{tpu_custom_call.1} parent=0
    #allocation2 [shape = 'u8[2048]{0}', space=vmem, size = 0x800, scoped, tag = 'input window, operand 0, single buffered']
    #allocation3 [shape = 's32[1]{0}', space=sflag, size = 0x4, scoped, tag = 'scoped memory for tpu_custom_call.1']
    #allocation4 [shape = 's32[1]{0}', space=sflag, size = 0x4, scoped, tag = 'scoped memory for tpu_custom_call.1']
    #allocation5 [shape = 'u8[1024]{0}', space=vmem, size = 0x400, scoped, tag = 'input window, operand 1, single buffered']
    #allocation6 [shape = 's32[1]{0}', space=sflag, size = 0x4, scoped, tag = 'scoped memory for tpu_custom_call.1']
    #allocation7 [shape = 'u8[1024]{0}', space=vmem, size = 0x400, scoped, tag = 'input window, operand 2, single buffered']
    #allocation8 [shape = 'u8[2048]{0}', space=vmem, size = 0x800, scoped, tag = 'output window, operand 0, single buffered']
    %8 = vsyncpa [#allocation3], 0
    %9 = vsyncpa [#allocation6], 0
    %10 = vsyncpa [#allocation4], 0
    // Predicated region
    $region2: #{tpu_custom_call.1} parent=1 // pred_check
      _
    $region3: #{tpu_custom_call.1} parent=1 // pred_check_branch
      %12 = sbr.rel (0) target = $region5
    $region4: #{tpu_custom_call.1} parent=1 // pred_region
      %14 = vsyncadd [#allocation3], 0
      %s16 = sshll.u32 %s0, 4
      %s17 = int_to_ptr.hbm [resolvable:$true] %s16
      %s18 = sshll.u32 [#allocation2], 4
      %s19 = int_to_ptr.vmem [resolvable:$true] %s18
      %21 = dma.hbm_to_vmem [thread:$0]  %s17, 64, %s19, [#allocation3]
    $region5: #{tpu_custom_call.1} parent=1 // pred_fallthru
      _
    // Predicated region
    $region6: #{tpu_custom_call.1} parent=1 // pred_check
      _
    $region7: #{tpu_custom_call.1} parent=1 // pred_check_branch
      %23 = sbr.rel (0) target = $region9
    $region8: #{tpu_custom_call.1} parent=1 // pred_region
      %25 = vsyncadd [#allocation6], 0
      %s27 = sshll.u32 %s1, 4
      %s28 = int_to_ptr.hbm [resolvable:$true] %s27
      %s29 = sshll.u32 [#allocation5], 4
      %s30 = int_to_ptr.vmem [resolvable:$true] %s29
      %32 = dma.hbm_to_vmem [thread:$0]  %s28, 32, %s30, [#allocation6]
    $region9: #{tpu_custom_call.1} parent=1 // pred_fallthru
      _
    // Predicated region
    $region10: #{tpu_custom_call.1} parent=1 // pred_check
      _
    $region11: #{tpu_custom_call.1} parent=1 // pred_check_branch
      %34 = sbr.rel (0) target = $region13
    $region12: #{tpu_custom_call.1} parent=1 // pred_region
      %36 = vsyncadd [#allocation6], 0
      %s38 = sshll.u32 %s2, 4
      %s39 = int_to_ptr.hbm [resolvable:$true] %s38
      %s40 = sshll.u32 [#allocation7], 4
      %s41 = int_to_ptr.vmem [resolvable:$true] %s40
      %43 = dma.hbm_to_vmem [thread:$0]  %s39, 32, %s41, [#allocation6]
    $region13: #{tpu_custom_call.1} parent=1 // pred_fallthru
      _
    // Predicated region
    $region14: #{tpu_custom_call.1} parent=1 // pred_check
      _
    $region15: #{tpu_custom_call.1} parent=1 // pred_check_branch
      %45 = sbr.rel (0) target = $region17
    $region16: #{tpu_custom_call.1} parent=1 // pred_region
      %47 = dma.done [#allocation3], 64
    $region17: #{tpu_custom_call.1} parent=1 // pred_fallthru
      _
    // Predicated region
    $region18: #{tpu_custom_call.1} parent=1 // pred_check
      _
    $region19: #{tpu_custom_call.1} parent=1 // pred_check_branch
      %49 = sbr.rel (0) target = $region21
    $region20: #{tpu_custom_call.1} parent=1 // pred_region
      %51 = dma.done [#allocation6], 32
    $region21: #{tpu_custom_call.1} parent=1 // pred_fallthru
      _
    // Predicated region
    $region22: #{tpu_custom_call.1} parent=1 // pred_check
      _
    $region23: #{tpu_custom_call.1} parent=1 // pred_check_branch
      %53 = sbr.rel (0) target = $region25
    $region24: #{tpu_custom_call.1} parent=1 // pred_region
      %55 = dma.done [#allocation6], 32
    $region25: #{tpu_custom_call.1} parent=1 // pred_fallthru
      _
    %v56 = vld [vmem:[#allocation2] sm:$0xf]
    %58 = vst [vmem:[#allocation1] ss:$4 sm:$0xff] %v56
    %v59 = vld.sshfl [vmem:[#allocation1] sm:$0xff pattern:$0x73625140]
    %v60 = vld.sshfl [vmem:[#allocation1 + $0x8] sm:$0xff pattern:$0x73625140]
    %vm63 = vcmask 1041408
    %v64 = vsel %vm63, %v59, 0.0
    %v65 = vsel %vm63, %v60, 0.0
    %v66 = vadd.f32 %v64, %v65
    %67 = vadd.xlane.f32.xlu0 %v66
    %v68 = vpop.xlane.xlu0 %67
    %v69 = vrcp.pop 256.0
    %v70 = vmul.f32 256.0, %v69
    %v71 = vsub.f32 1.0, %v70
    %v72 = vmul.f32 %v69, %v71
    %v73 = vadd.f32 %v69, %v72
    %vm74 = vweird.f32 %v69
    %v75 = vsel %vm74, %v69, %v73
    %v76 = vmul.f32 %v68, %v75
    %v79 = vunpack.c.l.s4 269488144
    %v80 = vunpack.c.0.s8 %v79
    %v81 = vperm.slane %v76, %v80
    %v83 = vsub.f32 %v56, %v81
    %v84 = vmul.f32 %v83, %v83
    %86 = vst [vmem:[#allocation1] ss:$4 sm:$0xff] %v84
    %v87 = vld.sshfl [vmem:[#allocation1] sm:$0xff pattern:$0x73625140]
    %v88 = vld.sshfl [vmem:[#allocation1 + $0x8] sm:$0xff pattern:$0x73625140]
    %v91 = vsel %vm63, %v87, 0.0
    %v92 = vsel %vm63, %v88, 0.0
    %v93 = vadd.f32 %v91, %v92
    %94 = vadd.xlane.f32.xlu0 %v93
    %v95 = vpop.xlane.xlu0 %94
    %v96 = vmul.f32 %v95, %v75
    %v97 = vadd.f32 %v96, 1e-08
    %v98 = vrsqrt.pop %v97
    %v99 = vmul.f32 %v98, %v97
    %v100 = vmul.f32 %v99, %v98
    %v101 = vmul.f32 0.5, %v100
    %v102 = vsub.f32 1.5, %v101
    %v103 = vmul.f32 %v98, %v102
    %vm104 = vweird.f32 %v97
    %vm105 = vweird.f32 %v98
    %vm106 = vmor %vm104, %vm105
    %v107 = vsel %vm106, %v98, %v103
    %v110 = vunpack.c.l.s4 269488144
    %v111 = vunpack.c.0.s8 %v110
    %v112 = vperm.slane %v107, %v111
    %v114 = vmul.f32 %v83, %v112
    %v115 = vld [vmem:[#allocation5] sm:$0x3]
    %v116 = vld [vmem:[#allocation7] sm:$0x3]
    %v118 = vperm.slane %v115, 0
    %v119 = vperm.slane %v115, 1
    %123 = vst [vmem:[#allocation1] ss:$4 sm:$0xff] %v114
    %v124 = vld.sshfl [vmem:[#allocation1] sm:$0xff pattern:$0x73625140]
    %v125 = vld.sshfl [vmem:[#allocation1 + $0x8] sm:$0xff pattern:$0x73625140]
    %v128 = vmul.f32 %v118, %v124
    %v129 = vmul.f32 %v119, %v125
    %v131 = vperm.slane %v116, 0
    %v132 = vperm.slane %v116, 1
    %v135 = vadd.f32 %v128, %v131
    %v136 = vadd.f32 %v129, %v132
    %v139 = vrot.slane %v136, 6
    %v140 = vsel %vm63, %v135, %v139
    %142 = vst [vmem:[#allocation8] sm:$0xf] %v140
    // Predicated region
    $region26: #{tpu_custom_call.1} parent=1 // pred_check
      _
    $region27: #{tpu_custom_call.1} parent=1 // pred_check_branch
      %144 = sbr.rel (0) target = $region29
    $region28: #{tpu_custom_call.1} parent=1 // pred_region
      %146 = vsyncadd [#allocation4], 0
      %s148 = sshll.u32 [#allocation8], 4
      %s149 = int_to_ptr.vmem [resolvable:$true] %s148
      %s150 = sshll.u32 %s3, 4
      %s151 = int_to_ptr.hbm [resolvable:$true] %s150
      %153 = dma.vmem_to_hbm [thread:$0]  %s149, 64, %s151, [#allocation4]
    $region29: #{tpu_custom_call.1} parent=1 // pred_fallthru
      _
    // Predicated region
    $region30: #{tpu_custom_call.1} parent=1 // pred_check
      _
    $region31: #{tpu_custom_call.1} parent=1 // pred_check_branch
      %155 = sbr.rel (0) target = $region33
    $region32: #{tpu_custom_call.1} parent=1 // pred_region
      %157 = dma.done [#allocation4], 64
    $region33: #{tpu_custom_call.1} parent=1 // pred_fallthru
      _
    %158 = vsyncpa [#allocation3], 1
    %159 = vsyncpa [#allocation6], 1
    %160 = vsyncpa [#allocation4], 1

</llo_original>
